<compile_context>
chip_gen: v7x
topology: tpu7x:2x2x1
jax: 0.10.0
libtpu: 0.0.40
codegen_flags: <defaults>
</compile_context>

<pallas_src>
import functools

import jax
import jax.numpy as jnp
from jax.experimental import pallas as pl
from jax.experimental.pallas import tpu as pltpu

MXU_TILE = 256        # fills the 256-wide v6e/v7x MXU; multiple of v5e's 128 / lane width
SUBLANE = 8
MAX_BATCH_TILE = 256  # batch tile cap; multiple of 8, sized well under v7x VMEM budgets
BN_EPS = 1e-5         # matches PyTorch BatchNorm1d default


def _round_up(n, m):
    return pl.cdiv(n, m) * m


def simplenet_kernel(x_ref, w1_ref, gamma_ref, beta_ref, w2_ref, b2_ref, o_ref,
                     sum_ref, sumsq_ref, scale_ref, shift_ref, *, inv_n):
    phase = pl.program_id(0)   # 0 = BN stats pass, 1 = apply pass
    tile = pl.program_id(1)    # batch tile index

    # layer1 Linear; bias omitted (cancelled by training-mode BN).  bf16 MXU, f32 acc.
    h = jnp.dot(x_ref[...].astype(jnp.bfloat16), w1_ref[...],
                preferred_element_type=jnp.float32)               # (tb, Hp) f32

    @pl.when(phase == 0)
    def _stats_pass():
        @pl.when(tile == 0)
        def _init():
            sum_ref[...] = jnp.zeros_like(sum_ref)
            sumsq_ref[...] = jnp.zeros_like(sumsq_ref)
        sum_ref[...] += jnp.sum(h, axis=0, keepdims=True)
        sumsq_ref[...] += jnp.sum(h * h, axis=0, keepdims=True)

    @pl.when(phase == 1)
    def _apply_pass():
        @pl.when(tile == 0)
        def _fold_bn():
            m = sum_ref[...] * inv_n
            var = jnp.maximum(sumsq_ref[...] * inv_n - m * m, 0.0)   # biased variance
            scale = gamma_ref[...] * jax.lax.rsqrt(var + BN_EPS)     # rsqrt -> EUP slot
            scale_ref[...] = scale
            shift_ref[...] = beta_ref[...] - m * scale
        # BN + ReLU folded: 1 mul, 1 add, 1 max; produced directly in bf16 so no
        # second (tb, Hp) f32 temporary lives alongside h.
        a = jnp.maximum(h * scale_ref[...] + shift_ref[...], 0.0).astype(jnp.bfloat16)
        o_ref[...] = (jnp.dot(a, w2_ref[...], preferred_element_type=jnp.float32)
                      + b2_ref[...])


def prepare_params(w1, b1, gamma, beta, w2, b2):
    """One-time (init-time) padding + bf16 casts.

    Hoisted out of the forward so no per-call weight-side HBM pass remains.
    b1 is accepted for parity with the PyTorch module but intentionally unused:
    a Linear bias immediately followed by training-mode BatchNorm cancels exactly.
    """
    del b1
    hidden = w1.shape[1]
    hp = _round_up(hidden, MXU_TILE)
    w1p = jnp.pad(w1, ((0, 0), (0, hp - hidden))).astype(jnp.bfloat16)
    gp = jnp.pad(jnp.reshape(gamma, (1, -1)), ((0, 0), (0, hp - hidden))).astype(jnp.float32)
    bp = jnp.pad(jnp.reshape(beta, (1, -1)), ((0, 0), (0, hp - hidden))).astype(jnp.float32)
    w2p = jnp.pad(w2, ((0, hp - hidden), (0, 0))).astype(jnp.bfloat16)
    b2p = jnp.reshape(b2, (1, -1)).astype(jnp.float32)
    return w1p, gp, bp, w2p, b2p


@jax.jit
def simplenet_forward(x, w1p, gp, bp, w2p, b2p):
    """x: (B, in_dim) f32.  Remaining args come from prepare_params()."""
    B, in_dim = x.shape
    hp = w1p.shape[1]
    out_dim = w2p.shape[1]

    tb = min(_round_up(B, SUBLANE), MAX_BATCH_TILE)
    bpad = _round_up(B, tb)
    if bpad != B:
        # Zero rows are exact for the BN stats (h of a zero row is 0 because b1 is
        # dropped); their junk output rows are sliced off below.
        x = jnp.pad(x, ((0, bpad - B), (0, 0)))
    nb = bpad // tb

    kernel = functools.partial(simplenet_kernel, inv_n=1.0 / B)

    # VMEM budget -> explicit scoped limit (capped well under v7x's 64 MiB physical).
    vmem_bytes = (2 * tb * in_dim * 4                   # x tile, double-buffered, f32
                  + w1p.size * 2 + w2p.size * 2         # resident bf16 weights
                  + (gp.size + bp.size + b2p.size) * 4  # BN affine + bias
                  + 2 * tb * out_dim * 4                # output tile, double-buffered
                  + 4 * hp * 4                          # BN scratch rows
                  + 2 * tb * hp * 4)                    # h (+ headroom for bf16 act)
    vmem_limit = int(min(max(2 * vmem_bytes, 16 * 1024 * 1024), 48 * 1024 * 1024))

    cost = pl.CostEstimate(
        flops=2 * (2 * bpad * in_dim * hp) + 2 * bpad * hp * out_dim + 10 * bpad * hp,
        transcendentals=hp,
        bytes_accessed=(2 * bpad * in_dim * 4            # x read in both phases
                        + w1p.size * 2 + w2p.size * 2
                        + (gp.size + bp.size + b2p.size) * 4
                        + bpad * out_dim * 4),
    )

    out = pl.pallas_call(
        kernel,
        out_shape=jax.ShapeDtypeStruct((bpad, out_dim), jnp.float32),
        grid_spec=pltpu.PrefetchScalarGridSpec(
            num_scalar_prefetch=0,
            grid=(2, nb),                                   # (phase, batch tile)
            in_specs=[
                pl.BlockSpec((tb, in_dim), lambda p, i: (i, 0)),   # x tile (refetched in phase 1)
                pl.BlockSpec((in_dim, hp), lambda p, i: (0, 0)),   # w1 resident
                pl.BlockSpec((1, hp), lambda p, i: (0, 0)),        # gamma resident
                pl.BlockSpec((1, hp), lambda p, i: (0, 0)),        # beta resident
                pl.BlockSpec((hp, out_dim), lambda p, i: (0, 0)),  # w2 resident
                pl.BlockSpec((1, out_dim), lambda p, i: (0, 0)),   # b2 resident
            ],
            out_specs=pl.BlockSpec((tb, out_dim), lambda p, i: (i, 0)),
            scratch_shapes=[
                pltpu.VMEM((1, hp), jnp.float32),   # BN sum
                pltpu.VMEM((1, hp), jnp.float32),   # BN sum of squares
                pltpu.VMEM((1, hp), jnp.float32),   # folded BN scale
                pltpu.VMEM((1, hp), jnp.float32),   # folded BN shift
            ],
        ),
        compiler_params=pltpu.CompilerParams(
            # Phase axis is inherently sequential; the batch-tile axis accumulates
            # into shared scratch in phase 0, so it is "arbitrary" too.
            dimension_semantics=("arbitrary", "arbitrary"),
            vmem_limit_bytes=vmem_limit,
        ),
        cost_estimate=cost,
    )(x, w1p, gp, bp, w2p, b2p)

    return out[:B] if bpad != B else out


def init_params(key, in_dim, n_hidden_1, out_dim):
    """Deterministic init mimicking PyTorch defaults (uniform +-1/sqrt(fan_in))."""
    k1, k2, k3, k4 = jax.random.split(key, 4)
    bound1 = 1.0 / jnp.sqrt(in_dim)
    w1 = jax.random.uniform(k1, (in_dim, n_hidden_1), jnp.float32, -bound1, bound1)
    b1 = jax.random.uniform(k2, (1, n_hidden_1), jnp.float32, -bound1, bound1)
    gamma = jnp.ones((1, n_hidden_1), jnp.float32)   # BatchNorm1d weight
    beta = jnp.zeros((1, n_hidden_1), jnp.float32)   # BatchNorm1d bias
    bound2 = 1.0 / jnp.sqrt(n_hidden_1)
    w2 = jax.random.uniform(k3, (n_hidden_1, out_dim), jnp.float32, -bound2, bound2)
    b2 = jax.random.uniform(k4, (1, out_dim), jnp.float32, -bound2, bound2)
    return w1, b1, gamma, beta, w2, b2


if __name__ == "__main__":
    in_dim, n_hidden_1, out_dim = 32, 64, 16
    batch = 8

    key = jax.random.PRNGKey(0)
    kx, kp = jax.random.split(key)
    x = jax.random.normal(kx, (batch, in_dim), jnp.float32)
    w1, b1, gamma, beta, w2, b2 = init_params(kp, in_dim, n_hidden_1, out_dim)

    # One-time weight preparation (padding + bf16 casts hoisted out of the forward).
    prepared = prepare_params(w1, b1, gamma, beta, w2, b2)

    out = jax.block_until_ready(simplenet_forward(x, *prepared))
    assert out.shape == (batch, out_dim)

    # Check 1: reference mirroring the kernel's numerics (bf16 MXU inputs, f32 stats,
    # folded BN, b1 dropped) -> tight tolerance.
    xb, w1b, w2b = (x.astype(jnp.bfloat16), w1.astype(jnp.bfloat16), w2.astype(jnp.bfloat16))
    h = jnp.dot(xb, w1b, preferred_element_type=jnp.float32)
    m = h.mean(0, keepdims=True)
    var = jnp.maximum((h * h).mean(0, keepdims=True) - m * m, 0.0)
    scale = gamma * jax.lax.rsqrt(var + BN_EPS)
    a = jnp.maximum(h * scale + (beta - m * scale), 0.0)
    ref_bf16 = jnp.dot(a.astype(jnp.bfloat16), w2b, preferred_element_type=jnp.float32) + b2
    assert jnp.allclose(out, ref_bf16, atol=2e-3, rtol=2e-3)

    # Check 2: full-f32 PyTorch-faithful reference (with b1, two-pass biased variance);
    # tolerance sized for bf16 MXU inputs.
    hf = x @ w1 + b1
    mu = hf.mean(0, keepdims=True)
    vf = ((hf - mu) ** 2).mean(0, keepdims=True)
    hn = (hf - mu) / jnp.sqrt(vf + BN_EPS) * gamma + beta
    ref_f32 = jnp.maximum(hn, 0.0) @ w2 + b2
    assert jnp.allclose(out, ref_f32, atol=3e-2, rtol=3e-2)

    print("KERNEL_OK")
</pallas_src>

<mosaic_0001>
module attributes {stable_mosaic.version = 11 : i64} {
  func.func @simplenet_kernel(%arg0: i32, %arg1: i32, %arg2: memref<8x32xf32, #tpu.memory_space<vmem>>, %arg3: memref<32x256xbf16, #tpu.memory_space<vmem>>, %arg4: memref<1x256xf32, #tpu.memory_space<vmem>>, %arg5: memref<1x256xf32, #tpu.memory_space<vmem>>, %arg6: memref<256x16xbf16, #tpu.memory_space<vmem>>, %arg7: memref<1x16xf32, #tpu.memory_space<vmem>>, %arg8: memref<8x16xf32, #tpu.memory_space<vmem>>, %arg9: memref<1x256xf32, #tpu.memory_space<vmem>>, %arg10: memref<1x256xf32, #tpu.memory_space<vmem>>, %arg11: memref<1x256xf32, #tpu.memory_space<vmem>>, %arg12: memref<1x256xf32, #tpu.memory_space<vmem>>) attributes {dimension_semantics = [#tpu.dimension_semantics<arbitrary>, #tpu.dimension_semantics<arbitrary>], iteration_bounds = array<i64: 2, 1>, scalar_prefetch = 0 : i64, scratch_operands = 4 : i64, tpu.core_type = #tpu.core_type<tc>, window_params = [{transform_indices = @transform_0, window_bounds = array<i64: 8, 32>}, {pipeline_mode = #tpu.pipeline_mode<synchronous>, transform_indices = @transform_1, window_bounds = array<i64: 32, 256>}, {pipeline_mode = #tpu.pipeline_mode<synchronous>, transform_indices = @transform_2, window_bounds = array<i64: 1, 256>}, {pipeline_mode = #tpu.pipeline_mode<synchronous>, transform_indices = @transform_3, window_bounds = array<i64: 1, 256>}, {pipeline_mode = #tpu.pipeline_mode<synchronous>, transform_indices = @transform_4, window_bounds = array<i64: 256, 16>}, {pipeline_mode = #tpu.pipeline_mode<synchronous>, transform_indices = @transform_5, window_bounds = array<i64: 1, 16>}, {transform_indices = @transform_6, window_bounds = array<i64: 8, 16>}]} {
    %c0 = arith.constant 0 : index
    %c0_0 = arith.constant 0 : index
    %0 = vector.load %arg2[%c0, %c0_0] : memref<8x32xf32, #tpu.memory_space<vmem>>, vector<8x32xf32>
    %1 = arith.truncf %0 : vector<8x32xf32> to vector<8x32xbf16>
    %c0_1 = arith.constant 0 : index
    %c0_2 = arith.constant 0 : index
    %2 = vector.load %arg3[%c0_1, %c0_2] : memref<32x256xbf16, #tpu.memory_space<vmem>>, vector<32x256xbf16>
    %cst = arith.constant dense<0.000000e+00> : vector<8x256xf32>
    %3 = tpu.matmul %1, %2, %cst {dimension_numbers = #tpu.dot_dimension_numbers<[1], [0], [0], [1], [0, 0, 1, 1], [], []>} : vector<8x32xbf16>, vector<32x256xbf16>, vector<8x256xf32> -> vector<8x256xf32>
    %c0_i32 = arith.constant 0 : i32
    %4 = arith.cmpi eq, %arg0, %c0_i32 : i32
    %5 = arith.extui %4 : i1 to i32
    %c0_i32_3 = arith.constant 0 : i32
    %6 = arith.cmpi ne, %5, %c0_i32_3 : i32
    scf.if %6 {
      %c0_i32_5 = arith.constant 0 : i32
      %10 = arith.cmpi eq, %arg1, %c0_i32_5 : i32
      %11 = arith.extui %10 : i1 to i32
      %c0_i32_6 = arith.constant 0 : i32
      %12 = arith.cmpi ne, %11, %c0_i32_6 : i32
      scf.if %12 {
        %cst_17 = arith.constant 0.000000e+00 : f32
        %24 = vector.broadcast %cst_17 : f32 to vector<1x256xf32>
        %c0_18 = arith.constant 0 : index
        %c0_19 = arith.constant 0 : index
        %25 = vector.load %arg9[%c0_18, %c0_19] : memref<1x256xf32, #tpu.memory_space<vmem>>, vector<1x256xf32>
        tpu.vector_store %arg9[%c0_18, %c0_19], %24 {strides = array<i32>} : memref<1x256xf32, #tpu.memory_space<vmem>>, vector<1x256xf32>,
        %cst_20 = arith.constant 0.000000e+00 : f32
        %26 = vector.broadcast %cst_20 : f32 to vector<1x256xf32>
        %c0_21 = arith.constant 0 : index
        %c0_22 = arith.constant 0 : index
        %27 = vector.load %arg10[%c0_21, %c0_22] : memref<1x256xf32, #tpu.memory_space<vmem>>, vector<1x256xf32>
        tpu.vector_store %arg10[%c0_21, %c0_22], %26 {strides = array<i32>} : memref<1x256xf32, #tpu.memory_space<vmem>>, vector<1x256xf32>,
      } else {
      }
      %c0_7 = arith.constant 0 : index
      %c0_8 = arith.constant 0 : index
      %13 = vector.load %arg9[%c0_7, %c0_8] : memref<1x256xf32, #tpu.memory_space<vmem>>, vector<1x256xf32>
      %cst_9 = arith.constant dense<0.000000e+00> : vector<256xf32>
      %14 = vector.multi_reduction <add>, %3, %cst_9 [0] : vector<8x256xf32> to vector<256xf32>
      %15 = vector.shape_cast %14 : vector<256xf32> to vector<1x256xf32>
      %16 = arith.addf %13, %15 : vector<1x256xf32>
      %c0_10 = arith.constant 0 : index
      %c0_11 = arith.constant 0 : index
      %17 = vector.load %arg9[%c0_10, %c0_11] : memref<1x256xf32, #tpu.memory_space<vmem>>, vector<1x256xf32>
      tpu.vector_store %arg9[%c0_10, %c0_11], %16 {strides = array<i32>} : memref<1x256xf32, #tpu.memory_space<vmem>>, vector<1x256xf32>,
      %c0_12 = arith.constant 0 : index
      %c0_13 = arith.constant 0 : index
      %18 = vector.load %arg10[%c0_12, %c0_13] : memref<1x256xf32, #tpu.memory_space<vmem>>, vector<1x256xf32>
      %19 = arith.mulf %3, %3 : vector<8x256xf32>
      %cst_14 = arith.constant dense<0.000000e+00> : vector<256xf32>
      %20 = vector.multi_reduction <add>, %19, %cst_14 [0] : vector<8x256xf32> to vector<256xf32>
      %21 = vector.shape_cast %20 : vector<256xf32> to vector<1x256xf32>
      %22 = arith.addf %18, %21 : vector<1x256xf32>
      %c0_15 = arith.constant 0 : index
      %c0_16 = arith.constant 0 : index
      %23 = vector.load %arg10[%c0_15, %c0_16] : memref<1x256xf32, #tpu.memory_space<vmem>>, vector<1x256xf32>
      tpu.vector_store %arg10[%c0_15, %c0_16], %22 {strides = array<i32>} : memref<1x256xf32, #tpu.memory_space<vmem>>, vector<1x256xf32>,
    } else {
    }
    %c1_i32 = arith.constant 1 : i32
    %7 = arith.cmpi eq, %arg0, %c1_i32 : i32
    %8 = arith.extui %7 : i1 to i32
    %c0_i32_4 = arith.constant 0 : i32
    %9 = arith.cmpi ne, %8, %c0_i32_4 : i32
    scf.if %9 {
      %c0_i32_5 = arith.constant 0 : i32
      %10 = arith.cmpi eq, %arg1, %c0_i32_5 : i32
      %11 = arith.extui %10 : i1 to i32
      %c0_i32_6 = arith.constant 0 : i32
      %12 = arith.cmpi ne, %11, %c0_i32_6 : i32
      scf.if %12 {
        %c0_19 = arith.constant 0 : index
        %c0_20 = arith.constant 0 : index
        %28 = vector.load %arg9[%c0_19, %c0_20] : memref<1x256xf32, #tpu.memory_space<vmem>>, vector<1x256xf32>
        %cst_21 = arith.constant 1.250000e-01 : f32
        %29 = vector.broadcast %cst_21 : f32 to vector<1x256xf32>
        %30 = arith.mulf %28, %29 : vector<1x256xf32>
        %c0_22 = arith.constant 0 : index
        %c0_23 = arith.constant 0 : index
        %31 = vector.load %arg10[%c0_22, %c0_23] : memref<1x256xf32, #tpu.memory_space<vmem>>, vector<1x256xf32>
        %cst_24 = arith.constant 1.250000e-01 : f32
        %32 = vector.broadcast %cst_24 : f32 to vector<1x256xf32>
        %33 = arith.mulf %31, %32 : vector<1x256xf32>
        %34 = arith.mulf %30, %30 : vector<1x256xf32>
        %35 = arith.subf %33, %34 : vector<1x256xf32>
        %cst_25 = arith.constant 0.000000e+00 : f32
        %36 = vector.broadcast %cst_25 : f32 to vector<1x256xf32>
        %37 = arith.maximumf %35, %36 : vector<1x256xf32>
        %c0_26 = arith.constant 0 : index
        %c0_27 = arith.constant 0 : index
        %38 = vector.load %arg4[%c0_26, %c0_27] : memref<1x256xf32, #tpu.memory_space<vmem>>, vector<1x256xf32>
        %cst_28 = arith.constant 9.99999974E-6 : f32
        %39 = vector.broadcast %cst_28 : f32 to vector<1x256xf32>
        %40 = arith.addf %37, %39 : vector<1x256xf32>
        %41 = math.rsqrt %40 : vector<1x256xf32>
        %42 = arith.mulf %38, %41 : vector<1x256xf32>
        %c0_29 = arith.constant 0 : index
        %c0_30 = arith.constant 0 : index
        %43 = vector.load %arg11[%c0_29, %c0_30] : memref<1x256xf32, #tpu.memory_space<vmem>>, vector<1x256xf32>
        tpu.vector_store %arg11[%c0_29, %c0_30], %42 {strides = array<i32>} : memref<1x256xf32, #tpu.memory_space<vmem>>, vector<1x256xf32>,
        %c0_31 = arith.constant 0 : index
        %c0_32 = arith.constant 0 : index
        %44 = vector.load %arg5[%c0_31, %c0_32] : memref<1x256xf32, #tpu.memory_space<vmem>>, vector<1x256xf32>
        %45 = arith.mulf %30, %42 : vector<1x256xf32>
        %46 = arith.subf %44, %45 : vector<1x256xf32>
        %c0_33 = arith.constant 0 : index
        %c0_34 = arith.constant 0 : index
        %47 = vector.load %arg12[%c0_33, %c0_34] : memref<1x256xf32, #tpu.memory_space<vmem>>, vector<1x256xf32>
        tpu.vector_store %arg12[%c0_33, %c0_34], %46 {strides = array<i32>} : memref<1x256xf32, #tpu.memory_space<vmem>>, vector<1x256xf32>,
      } else {
      }
      %c0_7 = arith.constant 0 : index
      %c0_8 = arith.constant 0 : index
      %13 = vector.load %arg11[%c0_7, %c0_8] : memref<1x256xf32, #tpu.memory_space<vmem>>, vector<1x256xf32>
      %14 = vector.broadcast %13 : vector<1x256xf32> to vector<8x256xf32>
      %15 = arith.mulf %3, %14 : vector<8x256xf32>
      %c0_9 = arith.constant 0 : index
      %c0_10 = arith.constant 0 : index
      %16 = vector.load %arg12[%c0_9, %c0_10] : memref<1x256xf32, #tpu.memory_space<vmem>>, vector<1x256xf32>
      %17 = vector.broadcast %16 : vector<1x256xf32> to vector<8x256xf32>
      %18 = arith.addf %15, %17 : vector<8x256xf32>
      %cst_11 = arith.constant 0.000000e+00 : f32
      %19 = vector.broadcast %cst_11 : f32 to vector<8x256xf32>
      %20 = arith.maximumf %18, %19 : vector<8x256xf32>
      %21 = arith.truncf %20 : vector<8x256xf32> to vector<8x256xbf16>
      %c0_12 = arith.constant 0 : index
      %c0_13 = arith.constant 0 : index
      %22 = vector.load %arg6[%c0_12, %c0_13] : memref<256x16xbf16, #tpu.memory_space<vmem>>, vector<256x16xbf16>
      %cst_14 = arith.constant dense<0.000000e+00> : vector<8x16xf32>
      %23 = tpu.matmul %21, %22, %cst_14 {dimension_numbers = #tpu.dot_dimension_numbers<[1], [0], [0], [1], [0, 0, 1, 1], [], []>} : vector<8x256xbf16>, vector<256x16xbf16>, vector<8x16xf32> -> vector<8x16xf32>
      %c0_15 = arith.constant 0 : index
      %c0_16 = arith.constant 0 : index
      %24 = vector.load %arg7[%c0_15, %c0_16] : memref<1x16xf32, #tpu.memory_space<vmem>>, vector<1x16xf32>
      %25 = vector.broadcast %24 : vector<1x16xf32> to vector<8x16xf32>
      %26 = arith.addf %23, %25 : vector<8x16xf32>
      %c0_17 = arith.constant 0 : index
      %c0_18 = arith.constant 0 : index
      %27 = vector.load %arg8[%c0_17, %c0_18] : memref<8x16xf32, #tpu.memory_space<vmem>>, vector<8x16xf32>
      tpu.vector_store %arg8[%c0_17, %c0_18], %26 {strides = array<i32>} : memref<8x16xf32, #tpu.memory_space<vmem>>, vector<8x16xf32>,
    } else {
    }
    return
  }
  func.func @transform_0(%arg0: i32, %arg1: i32) -> (i32, i32) {
    %c0_i32 = arith.constant 0 : i32
    %c0_i32_0 = arith.constant 0 : i32
    return %arg1, %c0_i32 : i32, i32
  }
  func.func @transform_1(%arg0: i32, %arg1: i32) -> (i32, i32) {
    %c0_i32 = arith.constant 0 : i32
    %c0_i32_0 = arith.constant 0 : i32
    %c0_i32_1 = arith.constant 0 : i32
    return %c0_i32, %c0_i32_0 : i32, i32
  }
  func.func @transform_2(%arg0: i32, %arg1: i32) -> (i32, i32) {
    %c0_i32 = arith.constant 0 : i32
    %c0_i32_0 = arith.constant 0 : i32
    %c0_i32_1 = arith.constant 0 : i32
    return %c0_i32, %c0_i32_0 : i32, i32
  }
  func.func @transform_3(%arg0: i32, %arg1: i32) -> (i32, i32) {
    %c0_i32 = arith.constant 0 : i32
    %c0_i32_0 = arith.constant 0 : i32
    %c0_i32_1 = arith.constant 0 : i32
    return %c0_i32, %c0_i32_0 : i32, i32
  }
  func.func @transform_4(%arg0: i32, %arg1: i32) -> (i32, i32) {
    %c0_i32 = arith.constant 0 : i32
    %c0_i32_0 = arith.constant 0 : i32
    %c0_i32_1 = arith.constant 0 : i32
    return %c0_i32, %c0_i32_0 : i32, i32
  }
  func.func @transform_5(%arg0: i32, %arg1: i32) -> (i32, i32) {
    %c0_i32 = arith.constant 0 : i32
    %c0_i32_0 = arith.constant 0 : i32
    %c0_i32_1 = arith.constant 0 : i32
    return %c0_i32, %c0_i32_0 : i32, i32
  }
  func.func @transform_6(%arg0: i32, %arg1: i32) -> (i32, i32) {
    %c0_i32 = arith.constant 0 : i32
    %c0_i32_0 = arith.constant 0 : i32
    return %arg1, %c0_i32 : i32, i32
  }
}

</mosaic_0001>

<llo_original>
// kernel: simplenet_forward.1
$region0: #{simplenet_forward.1}
  #allocation0 [shape = 'u32[]', space=smem, size = 0x4, offset = 0x4, fixed_abs, tag = 'smem constant byte address 0x4 - core index']
  #allocation1 [shape = 'u32[144,128]{1,0:T(1,128)}', space=vmem, size = 0x12000, scoped, tag = 'internal scratch']
  #allocation2 [shape = 'f32[1,256]{1,0:T(1,128)}', space=vmem, size = 0x400, scoped, tag = 'scratch operand']
  #allocation3 [shape = 'f32[1,256]{1,0:T(1,128)}', space=vmem, size = 0x400, scoped, tag = 'scratch operand']
  #allocation4 [shape = 'f32[1,256]{1,0:T(1,128)}', space=vmem, size = 0x400, scoped, tag = 'scratch operand']
  #allocation5 [shape = 'f32[1,256]{1,0:T(1,128)}', space=vmem, size = 0x400, scoped, tag = 'scratch operand']
  %s0 = inlined_call_operand.vmem [shape: f32[8,32], index: 0, kind: input, shape index: {}]
  %s1 = inlined_call_operand.vmem [shape: bf16[32,256], index: 1, kind: input, shape index: {}]
  %s2 = inlined_call_operand.vmem [shape: f32[1,256], index: 2, kind: input, shape index: {}]
  %s3 = inlined_call_operand.vmem [shape: f32[1,256], index: 3, kind: input, shape index: {}]
  %s4 = inlined_call_operand.vmem [shape: bf16[256,16], index: 4, kind: input, shape index: {}]
  %s5 = inlined_call_operand.vmem [shape: f32[1,16], index: 5, kind: input, shape index: {}]
  %s6 = inlined_call_operand.hbm [shape: f32[8,16], index: 6, kind: output, shape index: {}]
  %s7 = sld [smem:[#allocation0]]
  $region73: #{simplenet_forward.1} parent=0
    _
  %s9 = ssub.s32 1, %s7
  %s10 = scalar_select 0, %s9, %s7
  $region1: #{simplenet_forward.1} parent=0
    #allocation6 [shape = 'u8[4096]{0}', space=vmem, size = 0x1000, scoped, tag = 'output window, operand 0, single buffered']
    #allocation7 [shape = 's32[2]{0}', space=sflag, size = 0x8, scoped, tag = 'scoped memory for simplenet_forward.1']
    %11 = vsyncpa [#allocation7], 0
    loop: start=0, step=1, limit=4
    $region2: #{simplenet_forward.1} parent=1 // loop_pre_header
      _
    $region3: #{simplenet_forward.1} parent=1 // loop_header
      %s13 = sphi 0, %s17
      %p14 = scmp.ge.s32.totalorder %s13, 4
      %s20 = sphi 0, %s32
      %s21 = sphi 0, %s28
      %s22 = sphi 0, %s20
      %s23 = sphi 0, %s21
      %s24 = sphi 0, %s22
      %s25 = sphi 0, %s23
      %s35 = sphi 0, %s37
      %s38 = sphi 0, %s35
      %s39 = sphi 0, %s38
      %s55 = sphi 0, %s39
      %s59 = sphi 0, %s59
      %s61 = sphi 0, %s59
      %s62 = sphi 0, %s61
      %s76 = sphi 0, %s62
      %s80 = sphi 0, %s80
      %s82 = sphi 0, %s80
      %s83 = sphi 0, %s82
      %s97 = sphi 0, %s83
      %s101 = sphi 0, %s101
      %s103 = sphi 0, %s101
      %s104 = sphi 0, %s103
      %s118 = sphi 0, %s104
      %s122 = sphi 0, %s122
      %s124 = sphi 0, %s122
      %s125 = sphi 0, %s124
      %s139 = sphi 0, %s125
      %s143 = sphi 0, %s143
      %s145 = sphi 0, %s143
      %s146 = sphi 0, %s145
      %s160 = sphi 0, %s146
      %s166 = sphi 0, %s168
      %s169 = sphi 0, %s166
      %s170 = sphi 0, %s169
      %s186 = sphi 0, %s170
    $region4: #{simplenet_forward.1} parent=1 // loop_header_branch
      %16 = sbr.rel (%p14) target = $region8
    $region5: #{simplenet_forward.1} parent=1 // loop_body
      %s18 = ssub.s32 %s13, 1
      %s19 = ssub.s32 %s13, 2
      %s26 = sadd.s32 1, %s21
      %p27 = scmp.ge.s32.totalorder %s26, 1
      %s28 = scalar_select %p27, 0, %s26
      %s29 = sadd.s32 1, %s20
      %s30 = scalar_select %p27, %s29, %s20
      %p31 = scmp.ge.s32.totalorder %s30, 2
      %s32 = scalar_select %p31, 0, %s30
      %s33 = ssub.s32 %s21, %s28
      %p34 = scmp.eq.s32.totalorder %s33, 0
      %s36 = sadd.s32 %s35, 1
      %s37 = scalar_select %p34, %s35, %s36
      %p40 = pneg %p34
      %p41 = scmp.eq.s32.totalorder %s13, 1
      %p42 = por %p40, %p41
      %p43 = scmp.ne.s32.totalorder %s35, %s38
      %p44 = scmp.eq.s32.totalorder %s13, 0
      %p45 = por %p43, %p44
      %p46 = scmp.ne.s32.totalorder %s35, %s38
      %p47 = scmp.eq.s32.totalorder %s18, 1
      %p48 = por %p46, %p47
      %p49 = scmp.ne.s32.totalorder %s38, %s39
      %p50 = scmp.eq.s32.totalorder %s18, 0
      %p51 = por %p49, %p50
      %p52 = scmp.ne.s32.totalorder %s38, %s39
      %p53 = scmp.eq.s32.totalorder %s19, 1
      %p54 = por %p52, %p53
      %p56 = scmp.ne.s32.totalorder %s39, %s55
      %p57 = scmp.eq.s32.totalorder %s19, 0
      %p58 = por %p56, %p57
      %s60 = sadd.s32 %s59, 1
      %p63 = scmp.eq.s32.totalorder %s13, 1
      %p64 = scmp.ne.s32.totalorder %s59, %s61
      %p65 = scmp.eq.s32.totalorder %s13, 0
      %p66 = por %p64, %p65
      %p67 = scmp.ne.s32.totalorder %s59, %s61
      %p68 = scmp.eq.s32.totalorder %s18, 1
      %p69 = por %p67, %p68
      %p70 = scmp.ne.s32.totalorder %s61, %s62
      %p71 = scmp.eq.s32.totalorder %s18, 0
      %p72 = por %p70, %p71
      %p73 = scmp.ne.s32.totalorder %s61, %s62
      %p74 = scmp.eq.s32.totalorder %s19, 1
      %p75 = por %p73, %p74
      %p77 = scmp.ne.s32.totalorder %s62, %s76
      %p78 = scmp.eq.s32.totalorder %s19, 0
      %p79 = por %p77, %p78
      %s81 = sadd.s32 %s80, 1
      %p84 = scmp.eq.s32.totalorder %s13, 1
      %p85 = scmp.ne.s32.totalorder %s80, %s82
      %p86 = scmp.eq.s32.totalorder %s13, 0
      %p87 = por %p85, %p86
      %p88 = scmp.ne.s32.totalorder %s80, %s82
      %p89 = scmp.eq.s32.totalorder %s18, 1
      %p90 = por %p88, %p89
      %p91 = scmp.ne.s32.totalorder %s82, %s83
      %p92 = scmp.eq.s32.totalorder %s18, 0
      %p93 = por %p91, %p92
      %p94 = scmp.ne.s32.totalorder %s82, %s83
      %p95 = scmp.eq.s32.totalorder %s19, 1
      %p96 = por %p94, %p95
      %p98 = scmp.ne.s32.totalorder %s83, %s97
      %p99 = scmp.eq.s32.totalorder %s19, 0
      %p100 = por %p98, %p99
      %s102 = sadd.s32 %s101, 1
      %p105 = scmp.eq.s32.totalorder %s13, 1
      %p106 = scmp.ne.s32.totalorder %s101, %s103
      %p107 = scmp.eq.s32.totalorder %s13, 0
      %p108 = por %p106, %p107
      %p109 = scmp.ne.s32.totalorder %s101, %s103
      %p110 = scmp.eq.s32.totalorder %s18, 1
      %p111 = por %p109, %p110
      %p112 = scmp.ne.s32.totalorder %s103, %s104
      %p113 = scmp.eq.s32.totalorder %s18, 0
      %p114 = por %p112, %p113
      %p115 = scmp.ne.s32.totalorder %s103, %s104
      %p116 = scmp.eq.s32.totalorder %s19, 1
      %p117 = por %p115, %p116
      %p119 = scmp.ne.s32.totalorder %s104, %s118
      %p120 = scmp.eq.s32.totalorder %s19, 0
      %p121 = por %p119, %p120
      %s123 = sadd.s32 %s122, 1
      %p126 = scmp.eq.s32.totalorder %s13, 1
      %p127 = scmp.ne.s32.totalorder %s122, %s124
      %p128 = scmp.eq.s32.totalorder %s13, 0
      %p129 = por %p127, %p128
      %p130 = scmp.ne.s32.totalorder %s122, %s124
      %p131 = scmp.eq.s32.totalorder %s18, 1
      %p132 = por %p130, %p131
      %p133 = scmp.ne.s32.totalorder %s124, %s125
      %p134 = scmp.eq.s32.totalorder %s18, 0
      %p135 = por %p133, %p134
      %p136 = scmp.ne.s32.totalorder %s124, %s125
      %p137 = scmp.eq.s32.totalorder %s19, 1
      %p138 = por %p136, %p137
      %p140 = scmp.ne.s32.totalorder %s125, %s139
      %p141 = scmp.eq.s32.totalorder %s19, 0
      %p142 = por %p140, %p141
      %s144 = sadd.s32 %s143, 1
      %p147 = scmp.eq.s32.totalorder %s13, 1
      %p148 = scmp.ne.s32.totalorder %s143, %s145
      %p149 = scmp.eq.s32.totalorder %s13, 0
      %p150 = por %p148, %p149
      %p151 = scmp.ne.s32.totalorder %s143, %s145
      %p152 = scmp.eq.s32.totalorder %s18, 1
      %p153 = por %p151, %p152
      %p154 = scmp.ne.s32.totalorder %s145, %s146
      %p155 = scmp.eq.s32.totalorder %s18, 0
      %p156 = por %p154, %p155
      %p157 = scmp.ne.s32.totalorder %s145, %s146
      %p158 = scmp.eq.s32.totalorder %s19, 1
      %p159 = por %p157, %p158
      %p161 = scmp.ne.s32.totalorder %s146, %s160
      %p162 = scmp.eq.s32.totalorder %s19, 0
      %p163 = por %p161, %p162
      %s164 = ssub.s32 %s21, %s28
      %p165 = scmp.eq.s32.totalorder %s164, 0
      %s167 = sadd.s32 %s166, 1
      %s168 = scalar_select %p165, %s166, %s167
      %p171 = pneg %p165
      %p172 = scmp.eq.s32.totalorder %s13, 1
      %p173 = por %p171, %p172
      %p174 = scmp.ne.s32.totalorder %s166, %s169
      %p175 = scmp.eq.s32.totalorder %s13, 0
      %p176 = por %p174, %p175
      %p177 = scmp.ne.s32.totalorder %s166, %s169
      %p178 = scmp.eq.s32.totalorder %s18, 1
      %p179 = por %p177, %p178
      %p180 = scmp.ne.s32.totalorder %s169, %s170
      %p181 = scmp.eq.s32.totalorder %s18, 0
      %p182 = por %p180, %p181
      %p183 = scmp.ne.s32.totalorder %s169, %s170
      %p184 = scmp.eq.s32.totalorder %s19, 1
      %p185 = por %p183, %p184
      %p187 = scmp.ne.s32.totalorder %s170, %s186
      %p188 = scmp.eq.s32.totalorder %s19, 0
      %p189 = por %p187, %p188
      %p190 = scmp.le.s32.totalorder 1, %s13
      %p191 = scmp.lt.s32.totalorder %s13, 3
      %p192 = pnand %p190, %p191
      %p193 = pneg %p192
      // Predicated region
      $region9: #{simplenet_forward.1} parent=5 // pred_check
        _
      $region10: #{simplenet_forward.1} parent=5 // pred_check_branch
        %195 = sbr.rel (%p192) target = $region12
      $region11: #{simplenet_forward.1} parent=5 // pred_region
        %s196 = ssub.s32 %s13, 1
        // Predicated region
        $region13: #{simplenet_forward.1} parent=11 // pred_check
          %p197 = pneg %p51
        $region14: #{simplenet_forward.1} parent=11 // pred_check_branch
          %199 = sbr.rel (%p197) target = $region16
        $region15: #{simplenet_forward.1} parent=11 // pred_region
          %p200 = scmp.lt.s32.totalorder %s23, 0
          %s201 = scalar_select %p200, %s23, 0
          %s202 = smul.addr %s201, 8
          %s203 = scalar_lea.vmem %s0, %s202
        $region16: #{simplenet_forward.1} parent=11 // pred_fallthru
          _
        // Predicated region
        $region17: #{simplenet_forward.1} parent=11 // pred_check
          %p204 = pneg %p72
        $region18: #{simplenet_forward.1} parent=11 // pred_check_branch
          %206 = sbr.rel (%p204) target = $region20
        $region19: #{simplenet_forward.1} parent=11 // pred_region
          _
        $region20: #{simplenet_forward.1} parent=11 // pred_fallthru
          _
        // Predicated region
        $region21: #{simplenet_forward.1} parent=11 // pred_check
          %p207 = pneg %p93
        $region22: #{simplenet_forward.1} parent=11 // pred_check_branch
          %209 = sbr.rel (%p207) target = $region24
        $region23: #{simplenet_forward.1} parent=11 // pred_region
          _
        $region24: #{simplenet_forward.1} parent=11 // pred_fallthru
          _
        // Predicated region
        $region25: #{simplenet_forward.1} parent=11 // pred_check
          %p210 = pneg %p114
        $region26: #{simplenet_forward.1} parent=11 // pred_check_branch
          %212 = sbr.rel (%p210) target = $region28
        $region27: #{simplenet_forward.1} parent=11 // pred_region
          _
        $region28: #{simplenet_forward.1} parent=11 // pred_fallthru
          _
        // Predicated region
        $region29: #{simplenet_forward.1} parent=11 // pred_check
          %p213 = pneg %p135
        $region30: #{simplenet_forward.1} parent=11 // pred_check_branch
          %215 = sbr.rel (%p213) target = $region32
        $region31: #{simplenet_forward.1} parent=11 // pred_region
          _
        $region32: #{simplenet_forward.1} parent=11 // pred_fallthru
          _
        // Predicated region
        $region33: #{simplenet_forward.1} parent=11 // pred_check
          %p216 = pneg %p156
        $region34: #{simplenet_forward.1} parent=11 // pred_check_branch
          %218 = sbr.rel (%p216) target = $region36
        $region35: #{simplenet_forward.1} parent=11 // pred_region
          _
        $region36: #{simplenet_forward.1} parent=11 // pred_fallthru
          _
      $region12: #{simplenet_forward.1} parent=5 // pred_fallthru
        _
      %p219 = scmp.lt.s32.totalorder %s13, 2
      // Predicated region
      $region37: #{simplenet_forward.1} parent=5 // pred_check
        %p220 = pneg %p219
      $region38: #{simplenet_forward.1} parent=5 // pred_check_branch
        %222 = sbr.rel (%p220) target = $region40
      $region39: #{simplenet_forward.1} parent=5 // pred_region
        _
      $region40: #{simplenet_forward.1} parent=5 // pred_fallthru
        _
      %p223 = scmp.le.s32.totalorder 1, %s13
      %p224 = scmp.lt.s32.totalorder %s13, 3
      %p225 = pnand %p223, %p224
      %p226 = pneg %p225
      // Predicated region
      $region41: #{simplenet_forward.1} parent=5 // pred_check
        _
      $region42: #{simplenet_forward.1} parent=5 // pred_check_branch
        %228 = sbr.rel (%p225) target = $region44
      $region43: #{simplenet_forward.1} parent=5 // pred_region
        %s229 = ssub.s32 %s13, 1
        %p230 = scmp.lt.s32.totalorder %s23, 0
        %s231 = scalar_select %p230, %s23, 0
        %s232 = smul.addr %s231, 8
        %s233 = scalar_lea.vmem %s0, %s232
        %p234 = pneg %p51
        %p235 = pneg %p48
        %p236 = pneg %p72
        %p237 = pneg %p69
        %p238 = pneg %p93
        %p239 = pneg %p90
        %p240 = pneg %p114
        %p241 = pneg %p111
        %p242 = pneg %p135
        %p243 = pneg %p132
        %p244 = pneg %p156
        %p245 = pneg %p153
        %p246 = pneg %p182
        %p247 = pneg %p179
        %p248 = scmp.lt.s32.totalorder %s23, 0
        %s249 = scalar_select %p248, %s23, 0
        %s250 = smul.addr %s249, 8
        %s251 = scalar_lea.vmem %s0, %s250
        %v253 = vld [vmem:[%s251] sm:$0xff]
        %v254 = vpack.c.bf16 %v253, %v253
        %v255 = vld [vmem:[%s1] sm:$0xff]
        %v256 = vld [vmem:[%s1 + $0x8] sm:$0xff]
        %v257 = vld [vmem:[%s1 + $0x10] sm:$0xff]
        %v258 = vld [vmem:[%s1 + $0x18] sm:$0xff]
        %v263 = vunpack.c.l.b16 %v255
        %v264 = vunpack.c.h.b16 %v255
        %v265 = vunpack.c.l.b16 %v256
        %v266 = vunpack.c.h.b16 %v256
        %v267 = vunpack.c.l.b16 %v257
        %v268 = vunpack.c.h.b16 %v257
        %v269 = vunpack.c.l.b16 %v258
        %v270 = vunpack.c.h.b16 %v258
        %v271 = vpack.c.b16 %v265, %v263
        %v272 = vpack.c.b16 %v266, %v264
        %v273 = vpack.c.b16 %v269, %v267
        %v274 = vpack.c.b16 %v270, %v268
        %vm279 = vcmask 261120
        %v281 = vsel %vm279, %v254, 0
        %283 = vmatprep.subr.bf16.mxu0 %v272
        %284 = vmatpush1.bf16.msra.mxu0 %v271
        %285 = vmatprep.subr.bf16.mxu0 %v274
        %286 = vmatpush1.bf16.msra.mxu0 %v273
        %287 = vmatprep.subr.bf16.mxu0 0
        %288 = vmatpush1.bf16.msra.mxu0 0
        %289 = vmatprep.subr.bf16.mxu0 0
        %290 = vmatpush1.bf16.msra.mxu0 0
        %291 = vmatprep.subr.bf16.mxu0 0
        %292 = vmatpush1.bf16.msra.mxu0 0
        %293 = vmatprep.subr.bf16.mxu0 0
        %294 = vmatpush1.bf16.msra.mxu0 0
        %295 = vmatprep.subr.bf16.mxu0 0
        %296 = vmatpush1.bf16.msra.mxu0 0
        %297 = vmatprep.subr.bf16.mxu0 0
        %298 = vmatpush1.bf16.msra.mxu0 0
        %299 = vmatprep.subr.bf16.mxu0 0
        %300 = vmatpush1.bf16.msra.mxu0 0
        %301 = vmatprep.subr.bf16.mxu0 0
        %302 = vmatpush1.bf16.msra.mxu0 0
        %303 = vmatprep.subr.bf16.mxu0 0
        %304 = vmatpush1.bf16.msra.mxu0 0
        %305 = vmatprep.subr.bf16.mxu0 0
        %306 = vmatpush1.bf16.msra.mxu0 0
        %307 = vmatprep.subr.bf16.mxu0 0
        %308 = vmatpush1.bf16.msra.mxu0 0
        %309 = vmatprep.subr.bf16.mxu0 0
        %310 = vmatpush1.bf16.msra.mxu0 0
        %311 = vmatprep.subr.bf16.mxu0 0
        %312 = vmatpush1.bf16.msra.mxu0 0
        %313 = vmatprep.subr.bf16.mxu0 0
        %314 = vmatpush1.bf16.msra.mxu0 0
        %315 = vmatprep.mubr.bf16.mxu0 0
        %316 = vmatmul.mubr.bf16.gmra.mrb[0].mxu0 %v281
        %v317 = vpop.f32.mrb[0].mxu0
        %v318 = vadd.f32 0.0, %v317
        %v319 = vpop.f32.mrb[0].mxu0
        %v320 = vadd.f32 0.0, %v319
        %v321 = vpop.f32.mrb[0].mxu0
        %v322 = vpop.f32.mrb[0].mxu0
        %323 = vdwg.mxu0
        %p324 = scmp.eq.s32.totalorder %s22, 0
        // Predicated region
        $region45: #{simplenet_forward.1} parent=43 // pred_check
          %p325 = pneg %p324
        $region46: #{simplenet_forward.1} parent=43 // pred_check_branch
          %327 = sbr.rel (%p325) target = $region48
        $region47: #{simplenet_forward.1} parent=43 // pred_region
          %p328 = scmp.eq.s32.totalorder %s23, 0
          // Predicated region
          $region49: #{simplenet_forward.1} parent=47 // pred_check
            %p329 = pneg %p328
          $region50: #{simplenet_forward.1} parent=47 // pred_check_branch
            %331 = sbr.rel (%p329) target = $region52
          $region51: #{simplenet_forward.1} parent=47 // pred_region
            %v332 = vlaneseq
            %vm333 = vcmp.ge.s32.totalorder %v332, 0
            %vm334 = vcmp.lt.s32.totalorder %v332, 256
            %vm335 = vmand %vm333, %vm334
            %336 = vst.msk [vmem:[#allocation2] sm:$0x3] %vm335, 0.0
            %337 = vst.msk [vmem:[#allocation3] sm:$0x3] %vm335, 0.0
          $region52: #{simplenet_forward.1} parent=47 // pred_fallthru
            _
          %v338 = vld [vmem:[#allocation2] sm:$0x3]
          %v339 = vrot.slane %v318, 4
          %v340 = vadd.f32 %v318, %v339
          %v341 = vrot.slane %v340, 2
          %v342 = vadd.f32 %v340, %v341
          %v343 = vrot.slane %v342, 1
          %v344 = vadd.f32 %v342, %v343
          %v345 = vrot.slane %v320, 4
          %v346 = vadd.f32 %v320, %v345
          %v347 = vrot.slane %v346, 2
          %v348 = vadd.f32 %v346, %v347
          %v349 = vrot.slane %v348, 1
          %v350 = vadd.f32 %v348, %v349
          %v353 = vcombine.low %v344, %v350
          %v355 = vunpack.c.l.s4 1966171168
          %v356 = vunpack.c.0.s8 %v355
          %v357 = vlaneseq
          %v358 = vshrl.u32 %v357, 7
          %v359 = vsub.s32 %v356, %v358
          %v360 = vrot.slane %v353, %v359
          %v362 = vunpack.c.l.s4 1966171168
          %v363 = vunpack.c.0.s8 %v362
          %v364 = vlaneseq
          %v365 = vshrl.u32 %v364, 7
          %v366 = vsub.s32 %v363, %v365
          %v367 = vrot.slane %v360, %v366
          %v369 = vadd.f32 %v338, %v367
          %v370 = vlaneseq
          %vm371 = vcmp.ge.s32.totalorder %v370, 0
          %vm372 = vcmp.lt.s32.totalorder %v370, 256
          %vm373 = vmand %vm371, %vm372
          %374 = vst.msk [vmem:[#allocation2] sm:$0x3] %vm373, %v369
          %v375 = vld [vmem:[#allocation3] sm:$0x3]
          %v376 = vmul.f32 %v318, %v318
          %v377 = vmul.f32 %v320, %v320
          %v378 = vrot.slane %v376, 4
          %v379 = vadd.f32 %v376, %v378
          %v380 = vrot.slane %v379, 2
          %v381 = vadd.f32 %v379, %v380
          %v382 = vrot.slane %v381, 1
          %v383 = vadd.f32 %v381, %v382
          %v384 = vrot.slane %v377, 4
          %v385 = vadd.f32 %v377, %v384
          %v386 = vrot.slane %v385, 2
          %v387 = vadd.f32 %v385, %v386
          %v388 = vrot.slane %v387, 1
          %v389 = vadd.f32 %v387, %v388
          %v392 = vcombine.low %v383, %v389
          %v394 = vunpack.c.l.s4 1966171168
          %v395 = vunpack.c.0.s8 %v394
          %v396 = vlaneseq
          %v397 = vshrl.u32 %v396, 7
          %v398 = vsub.s32 %v395, %v397
          %v399 = vrot.slane %v392, %v398
          %v401 = vunpack.c.l.s4 1966171168
          %v402 = vunpack.c.0.s8 %v401
          %v403 = vlaneseq
          %v404 = vshrl.u32 %v403, 7
          %v405 = vsub.s32 %v402, %v404
          %v406 = vrot.slane %v399, %v405
          %v408 = vadd.f32 %v375, %v406
          %409 = vst.msk [vmem:[#allocation3] sm:$0x3] %vm373, %v408
        $region48: #{simplenet_forward.1} parent=43 // pred_fallthru
          _
        %p410 = scmp.eq.s32.totalorder %s22, 1
        // Predicated region
        $region53: #{simplenet_forward.1} parent=43 // pred_check
          %p411 = pneg %p410
        $region54: #{simplenet_forward.1} parent=43 // pred_check_branch
          %413 = sbr.rel (%p411) target = $region56
        $region55: #{simplenet_forward.1} parent=43 // pred_region
          %p414 = scmp.eq.s32.totalorder %s23, 0
          // Predicated region
          $region57: #{simplenet_forward.1} parent=55 // pred_check
            %p415 = pneg %p414
          $region58: #{simplenet_forward.1} parent=55 // pred_check_branch
            %417 = sbr.rel (%p415) target = $region60
          $region59: #{simplenet_forward.1} parent=55 // pred_region
            %v418 = vld [vmem:[#allocation2] sm:$0x3]
            %v419 = vmul.f32 %v418, 0.125
            %v420 = vld [vmem:[#allocation3] sm:$0x3]
            %v421 = vmul.f32 %v420, 0.125
            %v422 = vmul.f32 %v419, %v419
            %v423 = vsub.f32 %v421, %v422
            %v424 = vmax.f32 %v423, 0.0
            %v425 = vld [vmem:[%s2] sm:$0x3]
            %v426 = vadd.f32 %v424, 1e-05
            %v427 = vrsqrt.pop %v426
            %v428 = vmul.f32 %v425, %v427
            %v429 = vlaneseq
            %vm430 = vcmp.ge.s32.totalorder %v429, 0
            %vm431 = vcmp.lt.s32.totalorder %v429, 256
            %vm432 = vmand %vm430, %vm431
            %433 = vst.msk [vmem:[#allocation4] sm:$0x3] %vm432, %v428
            %v434 = vld [vmem:[%s3] sm:$0x3]
            %v435 = vmul.f32 %v419, %v428
            %v436 = vsub.f32 %v434, %v435
            %437 = vst.msk [vmem:[#allocation5] sm:$0x3] %vm432, %v436
          $region60: #{simplenet_forward.1} parent=55 // pred_fallthru
            _
          %v438 = vld [vmem:[#allocation4] sm:$0x3]
          %v440 = vlaneseq
          %v441 = vshrl.u32 %v440, 7
          %v442 = vsub.s32 0, %v441
          %v443 = vrot.slane %v438, %v442
          %v444 = vlaneseq
          %v445 = vshrl.u32 %v444, 7
          %v446 = vsub.s32 1, %v445
          %v447 = vrot.slane %v438, %v446
          %v450 = vmul.f32 %v318, %v443
          %v451 = vmul.f32 %v320, %v447
          %v452 = vld [vmem:[#allocation5] sm:$0x3]
          %v454 = vlaneseq
          %v455 = vshrl.u32 %v454, 7
          %v456 = vsub.s32 0, %v455
          %v457 = vrot.slane %v452, %v456
          %v458 = vlaneseq
          %v459 = vshrl.u32 %v458, 7
          %v460 = vsub.s32 1, %v459
          %v461 = vrot.slane %v452, %v460
          %v464 = vadd.f32 %v450, %v457
          %v465 = vadd.f32 %v451, %v461
          %v466 = vmax.f32 %v464, 0.0
          %v467 = vmax.f32 %v465, 0.0
          %v468 = vpack.c.bf16 %v466, %v466
          %v469 = vpack.c.bf16 %v467, %v467
          %v470 = vld [vmem:[%s4] sm:$0xf]
          %v471 = vld [vmem:[%s4 + $0x4] sm:$0xf]
          %v472 = vld [vmem:[%s4 + $0x8] sm:$0xf]
          %v473 = vld [vmem:[%s4 + $0xc] sm:$0xf]
          %v474 = vld [vmem:[%s4 + $0x10] sm:$0xf]
          %v475 = vld [vmem:[%s4 + $0x14] sm:$0xf]
          %v476 = vld [vmem:[%s4 + $0x18] sm:$0xf]
          %v477 = vld [vmem:[%s4 + $0x1c] sm:$0xf]
          %v478 = vld [vmem:[%s4 + $0x20] sm:$0xf]
          %v479 = vld [vmem:[%s4 + $0x24] sm:$0xf]
          %v480 = vld [vmem:[%s4 + $0x28] sm:$0xf]
          %v481 = vld [vmem:[%s4 + $0x2c] sm:$0xf]
          %v482 = vld [vmem:[%s4 + $0x30] sm:$0xf]
          %v483 = vld [vmem:[%s4 + $0x34] sm:$0xf]
          %v484 = vld [vmem:[%s4 + $0x38] sm:$0xf]
          %v485 = vld [vmem:[%s4 + $0x3c] sm:$0xf]
          %v486 = vld [vmem:[%s4 + $0x40] sm:$0xf]
          %v487 = vld [vmem:[%s4 + $0x44] sm:$0xf]
          %v488 = vld [vmem:[%s4 + $0x48] sm:$0xf]
          %v489 = vld [vmem:[%s4 + $0x4c] sm:$0xf]
          %v490 = vld [vmem:[%s4 + $0x50] sm:$0xf]
          %v491 = vld [vmem:[%s4 + $0x54] sm:$0xf]
          %v492 = vld [vmem:[%s4 + $0x58] sm:$0xf]
          %v493 = vld [vmem:[%s4 + $0x5c] sm:$0xf]
          %v494 = vld [vmem:[%s4 + $0x60] sm:$0xf]
          %v495 = vld [vmem:[%s4 + $0x64] sm:$0xf]
          %v496 = vld [vmem:[%s4 + $0x68] sm:$0xf]
          %v497 = vld [vmem:[%s4 + $0x6c] sm:$0xf]
          %v498 = vld [vmem:[%s4 + $0x70] sm:$0xf]
          %v499 = vld [vmem:[%s4 + $0x74] sm:$0xf]
          %v500 = vld [vmem:[%s4 + $0x78] sm:$0xf]
          %v501 = vld [vmem:[%s4 + $0x7c] sm:$0xf]
          %v502 = vld [vmem:[%s5] sm:$0x1]
          %v504 = vlaneseq
          %v505 = vshrl.u32 %v504, 7
          %v506 = vsub.s32 0, %v505
          %v507 = vrot.slane %v502, %v506
          %v541 = vunpack.c.l.b16 %v470
          %v542 = vunpack.c.l.b16 %v471
          %v543 = vunpack.c.l.b16 %v472
          %v544 = vunpack.c.l.b16 %v473
          %v545 = vunpack.c.l.b16 %v474
          %v546 = vunpack.c.l.b16 %v475
          %v547 = vunpack.c.l.b16 %v476
          %v548 = vunpack.c.l.b16 %v477
          %v549 = vunpack.c.l.b16 %v478
          %v550 = vunpack.c.l.b16 %v479
          %v551 = vunpack.c.l.b16 %v480
          %v552 = vunpack.c.l.b16 %v481
          %v553 = vunpack.c.l.b16 %v482
          %v554 = vunpack.c.l.b16 %v483
          %v555 = vunpack.c.l.b16 %v484
          %v556 = vunpack.c.l.b16 %v485
          %v557 = vunpack.c.l.b16 %v486
          %v558 = vunpack.c.l.b16 %v487
          %v559 = vunpack.c.l.b16 %v488
          %v560 = vunpack.c.l.b16 %v489
          %v561 = vunpack.c.l.b16 %v490
          %v562 = vunpack.c.l.b16 %v491
          %v563 = vunpack.c.l.b16 %v492
          %v564 = vunpack.c.l.b16 %v493
          %v565 = vunpack.c.l.b16 %v494
          %v566 = vunpack.c.l.b16 %v495
          %v567 = vunpack.c.l.b16 %v496
          %v568 = vunpack.c.l.b16 %v497
          %v569 = vunpack.c.l.b16 %v498
          %v570 = vunpack.c.l.b16 %v499
          %v571 = vunpack.c.l.b16 %v500
          %v572 = vunpack.c.l.b16 %v501
          %v573 = vpack.c.b16 %v542, %v541
          %v574 = vpack.c.b16 %v544, %v543
          %v575 = vpack.c.b16 %v546, %v545
          %v576 = vpack.c.b16 %v548, %v547
          %v577 = vpack.c.b16 %v550, %v549
          %v578 = vpack.c.b16 %v552, %v551
          %v579 = vpack.c.b16 %v554, %v553
          %v580 = vpack.c.b16 %v556, %v555
          %v581 = vpack.c.b16 %v558, %v557
          %v582 = vpack.c.b16 %v560, %v559
          %v583 = vpack.c.b16 %v562, %v561
          %v584 = vpack.c.b16 %v564, %v563
          %v585 = vpack.c.b16 %v566, %v565
          %v586 = vpack.c.b16 %v568, %v567
          %v587 = vpack.c.b16 %v570, %v569
          %v588 = vpack.c.b16 %v572, %v571
          %605 = vmatprep.subr.bf16.mxu0 0
          %606 = vmatpush1.bf16.msra.mxu0 %v573
          %607 = vmatprep.subr.bf16.mxu0 0
          %608 = vmatpush1.bf16.msra.mxu0 %v574
          %609 = vmatprep.subr.bf16.mxu0 0
          %610 = vmatpush1.bf16.msra.mxu0 %v575
          %611 = vmatprep.subr.bf16.mxu0 0
          %612 = vmatpush1.bf16.msra.mxu0 %v576
          %613 = vmatprep.subr.bf16.mxu0 0
          %614 = vmatpush1.bf16.msra.mxu0 %v577
          %615 = vmatprep.subr.bf16.mxu0 0
          %616 = vmatpush1.bf16.msra.mxu0 %v578
          %617 = vmatprep.subr.bf16.mxu0 0
          %618 = vmatpush1.bf16.msra.mxu0 %v579
          %619 = vmatprep.subr.bf16.mxu0 0
          %620 = vmatpush1.bf16.msra.mxu0 %v580
          %621 = vmatprep.subr.bf16.mxu0 0
          %622 = vmatpush1.bf16.msra.mxu0 %v581
          %623 = vmatprep.subr.bf16.mxu0 0
          %624 = vmatpush1.bf16.msra.mxu0 %v582
          %625 = vmatprep.subr.bf16.mxu0 0
          %626 = vmatpush1.bf16.msra.mxu0 %v583
          %627 = vmatprep.subr.bf16.mxu0 0
          %628 = vmatpush1.bf16.msra.mxu0 %v584
          %629 = vmatprep.subr.bf16.mxu0 0
          %630 = vmatpush1.bf16.msra.mxu0 %v585
          %631 = vmatprep.subr.bf16.mxu0 0
          %632 = vmatpush1.bf16.msra.mxu0 %v586
          %633 = vmatprep.subr.bf16.mxu0 0
          %634 = vmatpush1.bf16.msra.mxu0 %v587
          %635 = vmatprep.subr.bf16.mxu0 0
          %636 = vmatpush1.bf16.msra.mxu0 %v588
          %637 = vmatprep.mubr.bf16.mxu0 %v469
          %638 = vmatmul.mubr.bf16.gmra.mrb[0].mxu0 %v468
          %v639 = vpop.f32.mrb[0].mxu0
          %v640 = vadd.f32 %v507, %v639
          %v641 = vpop.f32.mrb[0].mxu0
          %v642 = vpop.f32.mrb[0].mxu0
          %v643 = vpop.f32.mrb[0].mxu0
          %644 = vdwg.mxu0
          %vm645 = vcmask 130048
          %646 = vst.msk [vmem:[#allocation6] sm:$0xff] %vm645, %v640
        $region56: #{simplenet_forward.1} parent=43 // pred_fallthru
          _
        // Predicated region
        $region61: #{simplenet_forward.1} parent=43 // pred_check
          %p647 = pneg %p179
        $region62: #{simplenet_forward.1} parent=43 // pred_check_branch
          %649 = sbr.rel (%p647) target = $region64
        $region63: #{simplenet_forward.1} parent=43 // pred_region
          %s651 = ssub.s32 128, 128
          %652 = vsyncadd [#allocation7], %s651
          %s653 = smul.addr %s23, 128
          %s654 = scalar_lea.hbm %s6, %s653
          %s656 = sshll.u32 [#allocation6], 4
          %s657 = int_to_ptr.vmem [resolvable:$true] %s656
          %659 = dma.vmem_to_hbm [thread:$0]  %s657, 128, %s654, [#allocation7]
        $region64: #{simplenet_forward.1} parent=43 // pred_fallthru
          _
        // Predicated region
        $region65: #{simplenet_forward.1} parent=43 // pred_check
          %p660 = pneg %p179
        $region66: #{simplenet_forward.1} parent=43 // pred_check_branch
          %662 = sbr.rel (%p660) target = $region68
        $region67: #{simplenet_forward.1} parent=43 // pred_region
          %663 = dma.done [#allocation7], 128
        $region68: #{simplenet_forward.1} parent=43 // pred_fallthru
          _
      $region44: #{simplenet_forward.1} parent=5 // pred_fallthru
        _
      %p664 = scmp.le.s32.totalorder 2, %s13
      // Predicated region
      $region69: #{simplenet_forward.1} parent=5 // pred_check
        %p665 = pneg %p664
      $region70: #{simplenet_forward.1} parent=5 // pred_check_branch
        %667 = sbr.rel (%p665) target = $region72
      $region71: #{simplenet_forward.1} parent=5 // pred_region
        %s668 = ssub.s32 %s13, 2
      $region72: #{simplenet_forward.1} parent=5 // pred_fallthru
        _
    $region6: #{simplenet_forward.1} parent=1 // loop_footer
      %s17 = sadd.s32 1, %s13
    $region7: #{simplenet_forward.1} parent=1 // loop_footer_branch
      %12 = sbr.rel target = $region3
    $region8: #{simplenet_forward.1} parent=1 // loop_exit
      _
    %669 = vsyncpa [#allocation7], 1
    %s670 = scalar_lea.sflag [#allocation7], 1
    %671 = vsyncpa %s670, 1

</llo_original>
